<compile_context>
chip_gen: v7x
topology: tpu7x:2x2x1
jax: 0.10.0
libtpu: 0.0.40
codegen_flags: <defaults>
</compile_context>

<pallas_src>
import jax
import jax.numpy as jnp
from jax.experimental import pallas as pl
from jax.experimental.pallas import tpu as pltpu

LANE = 128                         # lane width (last dim of every block)
SUBLANE = 8                        # f32 sublane granularity for block dims
MIN_TBG = 512                      # >= 64K lanes per grid step (overhead <~5%)
DEFAULT_TB_LANES = 512 * 1024      # batch tile (lanes) cap for the grid path
GRIDLESS_MAX_LANES = MIN_TBG * LANE        # single-block path below this
VMEM_LIMIT_BYTES = 48 * 1024 * 1024        # safe on v5e/v6e and < v7x's 64 MiB


def _linear_kernel(w_ref, b_ref, x_ref, o_ref):
    """VPU-only 3->1 linear layer on a sublane/lane-dense batch tile.

    w_ref: (IN,)           f32 in SMEM (flattened nn.Linear weight, OUT == 1)
    b_ref: (1,)            f32 in SMEM
    x_ref: (IN, TBG, 128)  VMEM, feature-major; batch = TBG*128 lanes
    o_ref: (TBG, 128)      VMEM, full unmasked vreg stores
    """
    acc = jnp.full(o_ref.shape, b_ref[0], dtype=jnp.float32)
    for i in range(x_ref.shape[0]):                       # IN == 3, static unroll
        acc = acc + x_ref[i].astype(jnp.float32) * w_ref[i]   # scalar * vreg FMA
    o_ref[...] = acc.astype(o_ref.dtype)


def prepare_params(weight, bias):
    """One-time parameter prep (at 'model init', not per forward call).

    weight: (OUT=1, IN) PyTorch layout -> (IN,) scalar vector for SMEM.
    bias:   (OUT=1,)                   -> (1,)  for SMEM.
    """
    assert weight.shape[0] == 1, "kernel is specialized to OUT == 1 (nn.Linear(3, 1))"
    return weight.reshape(-1).astype(jnp.float32), bias.reshape(-1).astype(jnp.float32)


def linear_forward_feature_major(xt, w_flat, b_flat, *, tb_lanes=DEFAULT_TB_LANES):
    """Preferred entry: xt is feature-major (IN, B) -> returns (B, 1).

    Using this directly (producer emits feature-major, or transpose-once-and-
    cache) avoids the wrapper transpose that otherwise dominates HBM traffic.
    """
    IN, B = xt.shape
    assert w_flat.shape == (IN,)
    out_dtype = xt.dtype

    # Pad to a 128-lane multiple only when needed (single extra pass; callers
    # should prefer 128-multiple batches).  No pad-to-tile-multiple: the grid
    # boundary tile is masked by Pallas instead.
    G = pl.cdiv(B, LANE)                    # number of 128-lane groups
    Bp = G * LANE
    if Bp != B:
        xt = jnp.pad(xt, ((0, 0), (0, Bp - B)))
    # Sublane-dense 3-D view; contiguous reshape on the feature-major slab.
    x3 = xt.reshape(IN, G, LANE)

    smem = pl.BlockSpec(memory_space=pltpu.MemorySpace.SMEM)
    cost = pl.CostEstimate(flops=7 * B, transcendentals=0,
                           bytes_accessed=(IN + 1) * 4 * B)

    if Bp <= GRIDLESS_MAX_LANES:
        # Small batch: single block, no grid -> no pipeline-step overhead.
        out = pl.pallas_call(
            _linear_kernel,
            out_shape=jax.ShapeDtypeStruct((G, LANE), out_dtype),
            in_specs=[smem, smem,
                      pl.BlockSpec(memory_space=pltpu.MemorySpace.VMEM)],
            out_specs=pl.BlockSpec(memory_space=pltpu.MemorySpace.VMEM),
            cost_estimate=cost,
        )(w_flat, b_flat, x3)
    else:
        # Large batch: tile only the lane-group axis.  Aim for >= ~8 tiles so
        # the parallel axis balances across v7x's 2 TCs, but never below
        # MIN_TBG (keeps per-step overhead small) nor above the VMEM cap.
        tbg = max(MIN_TBG, pl.cdiv(G, 8))
        tbg = min(tbg, tb_lanes // LANE)
        tbg = pl.cdiv(tbg, SUBLANE) * SUBLANE        # (8,128) block rule
        out = pl.pallas_call(
            _linear_kernel,
            out_shape=jax.ShapeDtypeStruct((G, LANE), out_dtype),
            grid=(pl.cdiv(G, tbg),),
            in_specs=[smem, smem,
                      pl.BlockSpec((IN, tbg, LANE), lambda i: (0, i, 0))],
            out_specs=pl.BlockSpec((tbg, LANE), lambda i: (i, 0)),
            compiler_params=pltpu.CompilerParams(
                dimension_semantics=("parallel",),
                vmem_limit_bytes=VMEM_LIMIT_BYTES),
            cost_estimate=cost,
        )(w_flat, b_flat, x3)

    # Back to the torch.nn.Linear output contract: (B, OUT) = (B, 1).
    return out.reshape(-1)[:B].reshape(B, 1)


def linear_forward(x, w_flat, b_flat, *, tb_lanes=DEFAULT_TB_LANES):
    """x: (B, IN) (torch contract).  Transposes to feature-major once.

    # TODO(synk): if the caller can supply feature-major (IN, B) input, use
    # linear_forward_feature_major directly and skip this transpose pass.
    """
    return linear_forward_feature_major(x.T, w_flat, b_flat, tb_lanes=tb_lanes)


if __name__ == "__main__":
    key = jax.random.PRNGKey(0)
    kx, kw, kb, kx2, kx3 = jax.random.split(key, 5)

    IN, OUT = 3, 1                              # nn.Linear(3, 1)

    # Mimic PyTorch's U(-1/sqrt(fan_in), +1/sqrt(fan_in)) init, deterministically.
    bound = 1.0 / jnp.sqrt(jnp.float32(IN))
    weight = jax.random.uniform(kw, (OUT, IN), minval=-bound, maxval=bound,
                                dtype=jnp.float32)
    bias = jax.random.uniform(kb, (OUT,), minval=-bound, maxval=bound,
                              dtype=jnp.float32)
    w_flat, b_flat = prepare_params(weight, bias)   # one-time param prep

    def ref_fwd(xv):
        return xv @ weight.T + bias

    # 1) Small batch: gridless single-block path.
    B = 8
    x = jax.random.normal(kx, (B, IN), dtype=jnp.float32)
    out = jax.block_until_ready(linear_forward(x, w_flat, b_flat))
    assert out.shape == (B, OUT)
    assert jnp.allclose(out, ref_fwd(x), atol=1e-5, rtol=1e-5)

    # 2) Non-128-multiple tiny batch (exercises the single pad-to-lane branch).
    B2 = 5
    x2 = jax.random.normal(kx2, (B2, IN), dtype=jnp.float32)
    out2 = jax.block_until_ready(linear_forward(x2, w_flat, b_flat))
    assert out2.shape == (B2, OUT)
    assert jnp.allclose(out2, ref_fwd(x2), atol=1e-5, rtol=1e-5)

    # 3) Larger batch: tiled grid path with a partial (masked) boundary tile.
    B3 = 80_000                     # 625 lane groups -> grid of 2, last partial
    x3 = jax.random.normal(kx3, (B3, IN), dtype=jnp.float32)
    out3 = jax.block_until_ready(linear_forward(x3, w_flat, b_flat))
    assert out3.shape == (B3, OUT)
    assert jnp.allclose(out3, ref_fwd(x3), atol=1e-4, rtol=1e-5)

    print("KERNEL_OK")
</pallas_src>

<mosaic_0001>
module attributes {stable_mosaic.version = 11 : i64} {
  func.func @_linear_kernel(%arg0: memref<3xf32, #tpu.memory_space<smem>>, %arg1: memref<1xf32, #tpu.memory_space<smem>>, %arg2: memref<3x1x128xf32, #tpu.memory_space<vmem>>, %arg3: memref<1x128xf32, #tpu.memory_space<vmem>>) attributes {dimension_semantics = [], scalar_prefetch = 0 : i64, scratch_operands = 0 : i64, tpu.core_type = #tpu.core_type<tc>} {
    %c0 = arith.constant 0 : index
    %0 = memref.load %arg1[%c0] : memref<1xf32, #tpu.memory_space<smem>>
    %1 = vector.broadcast %0 : f32 to vector<1x128xf32>
    %c0_0 = arith.constant 0 : index
    %c0_1 = arith.constant 0 : index
    %c0_2 = arith.constant 0 : index
    %2 = vector.load %arg2[%c0_0, %c0_1, %c0_2] : memref<3x1x128xf32, #tpu.memory_space<vmem>>, vector<1x1x128xf32>
    %3 = vector.shape_cast %2 : vector<1x1x128xf32> to vector<1x128xf32>
    %c0_3 = arith.constant 0 : index
    %4 = memref.load %arg0[%c0_3] : memref<3xf32, #tpu.memory_space<smem>>
    %5 = vector.broadcast %4 : f32 to vector<1x128xf32>
    %6 = arith.mulf %3, %5 : vector<1x128xf32>
    %7 = arith.addf %1, %6 : vector<1x128xf32>
    %c1 = arith.constant 1 : index
    %c0_4 = arith.constant 0 : index
    %c0_5 = arith.constant 0 : index
    %8 = vector.load %arg2[%c1, %c0_4, %c0_5] : memref<3x1x128xf32, #tpu.memory_space<vmem>>, vector<1x1x128xf32>
    %9 = vector.shape_cast %8 : vector<1x1x128xf32> to vector<1x128xf32>
    %c1_6 = arith.constant 1 : index
    %10 = memref.load %arg0[%c1_6] : memref<3xf32, #tpu.memory_space<smem>>
    %11 = vector.broadcast %10 : f32 to vector<1x128xf32>
    %12 = arith.mulf %9, %11 : vector<1x128xf32>
    %13 = arith.addf %7, %12 : vector<1x128xf32>
    %c2 = arith.constant 2 : index
    %c0_7 = arith.constant 0 : index
    %c0_8 = arith.constant 0 : index
    %14 = vector.load %arg2[%c2, %c0_7, %c0_8] : memref<3x1x128xf32, #tpu.memory_space<vmem>>, vector<1x1x128xf32>
    %15 = vector.shape_cast %14 : vector<1x1x128xf32> to vector<1x128xf32>
    %c2_9 = arith.constant 2 : index
    %16 = memref.load %arg0[%c2_9] : memref<3xf32, #tpu.memory_space<smem>>
    %17 = vector.broadcast %16 : f32 to vector<1x128xf32>
    %18 = arith.mulf %15, %17 : vector<1x128xf32>
    %19 = arith.addf %13, %18 : vector<1x128xf32>
    %c0_10 = arith.constant 0 : index
    %c0_11 = arith.constant 0 : index
    %20 = vector.load %arg3[%c0_10, %c0_11] : memref<1x128xf32, #tpu.memory_space<vmem>>, vector<1x128xf32>
    tpu.vector_store %arg3[%c0_10, %c0_11], %19 {strides = array<i32>} : memref<1x128xf32, #tpu.memory_space<vmem>>, vector<1x128xf32>,
    return
  }
}

</mosaic_0001>

<llo_original>
// kernel: tpu_custom_call.1
$region0: #{tpu_custom_call.1}
  #allocation0 [shape = 'u32[]', space=smem, size = 0x4, offset = 0x4, fixed_abs, tag = 'smem constant byte address 0x4 - core index']
  #allocation1 [shape = 'u32[144,128]{1,0:T(1,128)}', space=vmem, size = 0x12000, scoped, tag = 'internal scratch']
  #allocation2 [shape = 'f32[1]{0:T(128)S(6)}', space=smem, size = 0x200, scoped, tag = 'scoped memory for tpu_custom_call.1']
  %s0 = inlined_call_operand.vmem [shape: f32[3], index: 0, kind: input, shape index: {}]
  %s1 = inlined_call_operand.<no memory space> [shape: f32[1], index: 1, kind: input, shape index: {}]
  %s2 = inlined_call_operand.vmem [shape: f32[3,1,128], index: 2, kind: input, shape index: {}]
  %s3 = inlined_call_operand.hbm [shape: f32[1,128], index: 3, kind: output, shape index: {}]
  %s4 = sld [smem:[#allocation0]]
  $region26: #{tpu_custom_call.1} parent=0
    _
  %s6 = ssub.s32 1, %s4
  %s7 = scalar_select 0, %s6, %s4
  %8 = sst [smem:[#allocation2]] %s1
  $region1: #{tpu_custom_call.1} parent=0
    #allocation3 [shape = 'u8[512]{0}', space=smem, size = 0x200, scoped, tag = 'input window, operand 0, single buffered']
    #allocation4 [shape = 's32[1]{0}', space=sflag, size = 0x4, scoped, tag = 'scoped memory for tpu_custom_call.1']
    #allocation5 [shape = 's32[1]{0}', space=sflag, size = 0x4, scoped, tag = 'scoped memory for tpu_custom_call.1']
    #allocation6 [shape = 'u8[512]{0}', space=vmem, size = 0x400, scoped, tag = 'output window, operand 0, single buffered']
    %9 = vsyncpa [#allocation5], 0
    %10 = vsyncpa [#allocation4], 0
    // Predicated region
    $region2: #{tpu_custom_call.1} parent=1 // pred_check
      _
    $region3: #{tpu_custom_call.1} parent=1 // pred_check_branch
      %12 = sbr.rel (0) target = $region5
    $region4: #{tpu_custom_call.1} parent=1 // pred_region
      %s14 = ssub.s32 16, 16
      %15 = vsyncadd [#allocation5], %s14
      %s17 = sshll.u32 %s0, 4
      %s18 = int_to_ptr.vmem [resolvable:$true] %s17
      %20 = dma.vmem_to_smem %s18, 16, [#allocation3], [#allocation5]
    $region5: #{tpu_custom_call.1} parent=1 // pred_fallthru
      _
    // Predicated region
    $region6: #{tpu_custom_call.1} parent=1 // pred_check
      _
    $region7: #{tpu_custom_call.1} parent=1 // pred_check_branch
      %22 = sbr.rel (0) target = $region9
    $region8: #{tpu_custom_call.1} parent=1 // pred_region
      _
    $region9: #{tpu_custom_call.1} parent=1 // pred_fallthru
      _
    // Predicated region
    $region10: #{tpu_custom_call.1} parent=1 // pred_check
      _
    $region11: #{tpu_custom_call.1} parent=1 // pred_check_branch
      %24 = sbr.rel (0) target = $region13
    $region12: #{tpu_custom_call.1} parent=1 // pred_region
      _
    $region13: #{tpu_custom_call.1} parent=1 // pred_fallthru
      _
    // Predicated region
    $region14: #{tpu_custom_call.1} parent=1 // pred_check
      _
    $region15: #{tpu_custom_call.1} parent=1 // pred_check_branch
      %26 = sbr.rel (0) target = $region17
    $region16: #{tpu_custom_call.1} parent=1 // pred_region
      %27 = dma.done [#allocation5], 16
    $region17: #{tpu_custom_call.1} parent=1 // pred_fallthru
      _
    %28 = sfence
    %s29 = sld [smem:[#allocation2]]
    %v30 = vstv %s29
    %v31 = vld [vmem:[%s2] sm:$0x1]
    %s32 = sld [smem:[#allocation3]]
    %v33 = vstv %s32
    %v34 = vmul.f32 %v31, %v33
    %v35 = vadd.f32 %v30, %v34
    %s36 = scalar_lea.vmem %s2, 1
    %v37 = vld [vmem:[%s36] sm:$0x1]
    %s38 = sld [smem:[#allocation3 + $0x1]]
    %v39 = vstv %s38
    %v40 = vmul.f32 %v37, %v39
    %v41 = vadd.f32 %v35, %v40
    %s42 = scalar_lea.vmem %s2, 2
    %v43 = vld [vmem:[%s42] sm:$0x1]
    %s44 = sld [smem:[#allocation3 + $0x2]]
    %v45 = vstv %s44
    %v46 = vmul.f32 %v43, %v45
    %v47 = vadd.f32 %v41, %v46
    %48 = vst [vmem:[#allocation6] sm:$0x1] %v47
    // Predicated region
    $region18: #{tpu_custom_call.1} parent=1 // pred_check
      _
    $region19: #{tpu_custom_call.1} parent=1 // pred_check_branch
      %50 = sbr.rel (0) target = $region21
    $region20: #{tpu_custom_call.1} parent=1 // pred_region
      %s52 = ssub.s32 16, 16
      %53 = vsyncadd [#allocation4], %s52
      %s55 = sshll.u32 [#allocation6], 4
      %s56 = int_to_ptr.vmem [resolvable:$true] %s55
      %58 = dma.vmem_to_hbm [thread:$0]  %s56, 16, %s3, [#allocation4]
    $region21: #{tpu_custom_call.1} parent=1 // pred_fallthru
      _
    // Predicated region
    $region22: #{tpu_custom_call.1} parent=1 // pred_check
      _
    $region23: #{tpu_custom_call.1} parent=1 // pred_check_branch
      %60 = sbr.rel (0) target = $region25
    $region24: #{tpu_custom_call.1} parent=1 // pred_region
      %61 = dma.done [#allocation4], 16
    $region25: #{tpu_custom_call.1} parent=1 // pred_fallthru
      _
    %62 = vsyncpa [#allocation4], 1
    %63 = vsyncpa [#allocation5], 1

</llo_original>
